<compile_context>
chip_gen: v5e
topology: v5e:2x2
jax: 0.10.0
libtpu: 0.0.40
codegen_flags: <defaults>
</compile_context>

<pallas_src>
import jax
import jax.numpy as jnp
from jax.experimental import pallas as pl
from jax.experimental.pallas import tpu as pltpu

IN_FEATURES = 133
OUT_FEATURES = 93


def _round_up(x, m):
    return ((x + m - 1) // m) * m


def _linear_add_kernel(x_ref, wt_ref, b_ref, t1_ref, o_ref):
    # x: (TM, K), wt: (K, N) (pre-transposed once at setup) -> MXU directly.
    y = jnp.dot(
        x_ref[...],
        wt_ref[...],
        preferred_element_type=jnp.float32,
        precision=jax.lax.Precision.HIGHEST,
    )
    # Bias (1, N) broadcast + t1 add: free VPU filler under the MXU / DMA.
    o_ref[...] = (y + b_ref[...] + t1_ref[...]).astype(o_ref.dtype)


def make_linear_add(weight, bias, *, tm_max=1024):
    """One-time parameter prep + jitted forward: y = v1 @ weight.T + bias + t1."""
    N, K = weight.shape
    f32 = jnp.float32

    # Hoisted out of the per-call path: done exactly once.
    wt = jnp.asarray(weight, f32).T            # (K, N) feeds the MXU directly
    b = jnp.asarray(bias, f32).reshape(1, N)   # (1, N) resident bias row

    def fwd(v1, t1):
        M = v1.shape[0]
        x = v1.astype(f32)
        t = t1.astype(f32)

        if M <= 8:
            # Spec-size fast path: one full-array block, zero padding/slicing.
            TM, M_pad = M, M
        else:
            # >= 2 grid steps when possible (uses both TCs on v7x), 8-aligned tiles.
            TM = min(_round_up(pl.cdiv(M, 2), 8), tm_max)
            M_pad = _round_up(M, TM)
            if M_pad != M:
                x = jnp.pad(x, ((0, M_pad - M), (0, 0)))
                t = jnp.pad(t, ((0, M_pad - M), (0, 0)))

        grid_m = M_pad // TM

        cost = pl.CostEstimate(
            flops=2 * M * K * N,
            transcendentals=0,
            bytes_accessed=4 * (M * K + K * N + N + 2 * M * N),
        )

        out = pl.pallas_call(
            _linear_add_kernel,
            out_shape=jax.ShapeDtypeStruct((M_pad, N), f32),
            grid_spec=pltpu.PrefetchScalarGridSpec(
                num_scalar_prefetch=0,
                grid=(grid_m,),
                in_specs=[
                    pl.BlockSpec((TM, K), lambda i: (i, 0)),   # activation streams over M
                    pl.BlockSpec((K, N), lambda i: (0, 0)),    # weight resident
                    pl.BlockSpec((1, N), lambda i: (0, 0)),    # bias resident
                    pl.BlockSpec((TM, N), lambda i: (i, 0)),   # t1 streams over M
                ],
                out_specs=pl.BlockSpec((TM, N), lambda i: (i, 0)),
            ),
            compiler_params=pltpu.CompilerParams(
                dimension_semantics=("parallel",)),
            cost_estimate=cost,
        )(x, wt, b, t)

        if M_pad != M:
            out = out[:M]
        return out

    return jax.jit(fwd)


if __name__ == "__main__":
    key = jax.random.PRNGKey(0)
    k_v1, k_t1, k_w, k_b = jax.random.split(key, 4)

    # Inputs consistent with the module: v1 (2, 133), t1 (2, 93)
    v1 = jax.random.normal(k_v1, (2, IN_FEATURES), dtype=jnp.float32)
    t1 = jax.random.normal(k_t1, (2, OUT_FEATURES), dtype=jnp.float32)

    # Deterministic parameter init mimicking torch.nn.Linear (uniform +/- 1/sqrt(fan_in))
    bound = 1.0 / (IN_FEATURES ** 0.5)
    weight = jax.random.uniform(
        k_w, (OUT_FEATURES, IN_FEATURES), dtype=jnp.float32,
        minval=-bound, maxval=bound)
    bias = jax.random.uniform(
        k_b, (OUT_FEATURES,), dtype=jnp.float32, minval=-bound, maxval=bound)

    linear_add = make_linear_add(weight, bias)   # one-time parameter prep

    out = linear_add(v1, t1)
    out = jax.block_until_ready(out)

    # Sanity check against a pure-JAX reference
    ref = v1 @ weight.T + bias + t1
    assert out.shape == (2, OUT_FEATURES), out.shape
    assert jnp.allclose(out, ref, atol=2e-3, rtol=2e-3), float(
        jnp.max(jnp.abs(out - ref)))

    print("KERNEL_OK")
</pallas_src>

<mosaic_0001>
module attributes {stable_mosaic.version = 11 : i64} {
  func.func @_linear_add_kernel(%arg0: i32, %arg1: memref<2x133xf32, #tpu.memory_space<vmem>>, %arg2: memref<133x93xf32, #tpu.memory_space<vmem>>, %arg3: memref<1x93xf32, #tpu.memory_space<vmem>>, %arg4: memref<2x93xf32, #tpu.memory_space<vmem>>, %arg5: memref<2x93xf32, #tpu.memory_space<vmem>>) attributes {dimension_semantics = [#tpu.dimension_semantics<parallel>], iteration_bounds = array<i64: 1>, scalar_prefetch = 0 : i64, scratch_operands = 0 : i64, tpu.core_type = #tpu.core_type<tc>, window_params = [{transform_indices = @transform_0, window_bounds = array<i64: 2, 133>}, {pipeline_mode = #tpu.pipeline_mode<synchronous>, transform_indices = @transform_1, window_bounds = array<i64: 133, 93>}, {pipeline_mode = #tpu.pipeline_mode<synchronous>, transform_indices = @transform_2, window_bounds = array<i64: 1, 93>}, {transform_indices = @transform_3, window_bounds = array<i64: 2, 93>}, {transform_indices = @transform_4, window_bounds = array<i64: 2, 93>}]} {
    %c0 = arith.constant 0 : index
    %c0_0 = arith.constant 0 : index
    %0 = vector.load %arg1[%c0, %c0_0] : memref<2x133xf32, #tpu.memory_space<vmem>>, vector<2x133xf32>
    %c0_1 = arith.constant 0 : index
    %c0_2 = arith.constant 0 : index
    %1 = vector.load %arg2[%c0_1, %c0_2] : memref<133x93xf32, #tpu.memory_space<vmem>>, vector<133x93xf32>
    %cst = arith.constant dense<0.000000e+00> : vector<2x93xf32>
    %2 = tpu.matmul %0, %1, %cst {dimension_numbers = #tpu.dot_dimension_numbers<[1], [0], [0], [1], [0, 0, 1, 1], [], []>, precision = #tpu.contract_precision<fp32>} : vector<2x133xf32>, vector<133x93xf32>, vector<2x93xf32> -> vector<2x93xf32>
    %c0_3 = arith.constant 0 : index
    %c0_4 = arith.constant 0 : index
    %3 = vector.load %arg3[%c0_3, %c0_4] : memref<1x93xf32, #tpu.memory_space<vmem>>, vector<1x93xf32>
    %4 = vector.broadcast %3 : vector<1x93xf32> to vector<2x93xf32>
    %5 = arith.addf %2, %4 : vector<2x93xf32>
    %c0_5 = arith.constant 0 : index
    %c0_6 = arith.constant 0 : index
    %6 = vector.load %arg4[%c0_5, %c0_6] : memref<2x93xf32, #tpu.memory_space<vmem>>, vector<2x93xf32>
    %7 = arith.addf %5, %6 : vector<2x93xf32>
    %c0_7 = arith.constant 0 : index
    %c0_8 = arith.constant 0 : index
    %8 = vector.load %arg5[%c0_7, %c0_8] : memref<2x93xf32, #tpu.memory_space<vmem>>, vector<2x93xf32>
    tpu.vector_store %arg5[%c0_7, %c0_8], %7 {strides = array<i32>} : memref<2x93xf32, #tpu.memory_space<vmem>>, vector<2x93xf32>,
    return
  }
  func.func @transform_0(%arg0: i32) -> (i32, i32) {
    %c0_i32 = arith.constant 0 : i32
    %c0_i32_0 = arith.constant 0 : i32
    return %arg0, %c0_i32 : i32, i32
  }
  func.func @transform_1(%arg0: i32) -> (i32, i32) {
    %c0_i32 = arith.constant 0 : i32
    %c0_i32_0 = arith.constant 0 : i32
    %c0_i32_1 = arith.constant 0 : i32
    return %c0_i32, %c0_i32_0 : i32, i32
  }
  func.func @transform_2(%arg0: i32) -> (i32, i32) {
    %c0_i32 = arith.constant 0 : i32
    %c0_i32_0 = arith.constant 0 : i32
    %c0_i32_1 = arith.constant 0 : i32
    return %c0_i32, %c0_i32_0 : i32, i32
  }
  func.func @transform_3(%arg0: i32) -> (i32, i32) {
    %c0_i32 = arith.constant 0 : i32
    %c0_i32_0 = arith.constant 0 : i32
    return %arg0, %c0_i32 : i32, i32
  }
  func.func @transform_4(%arg0: i32) -> (i32, i32) {
    %c0_i32 = arith.constant 0 : i32
    %c0_i32_0 = arith.constant 0 : i32
    return %arg0, %c0_i32 : i32, i32
  }
}

</mosaic_0001>

<llo_original>
// kernel: fwd.1
$region0: #{fwd.1}
  #allocation0 [shape = 'u32[]', space=smem, size = 0x4, offset = 0x4, fixed_abs, tag = 'smem constant byte address 0x4 - core index']
  #allocation1 [shape = 'u32[72,128]{1,0:T(1,128)}', space=vmem, size = 0x9000, scoped, tag = 'internal scratch']
  %s0 = inlined_call_operand.hbm [shape: f32[2,133], index: 0, kind: input, shape index: {}]
  %s1 = inlined_call_operand.hbm [shape: f32[133,93], index: 1, kind: input, shape index: {}]
  %s2 = inlined_call_operand.vmem [shape: f32[1,93], index: 2, kind: input, shape index: {}]
  %s3 = inlined_call_operand.hbm [shape: f32[2,93], index: 3, kind: input, shape index: {}]
  %s4 = inlined_call_operand.hbm [shape: f32[2,93], index: 4, kind: output, shape index: {}]
  %s5 = sld [smem:[#allocation0]]
  $region38: #{fwd.1} parent=0
    _
  %s7 = ssub.s32 1, %s5
  %s8 = scalar_select 0, %s7, %s5
  $region1: #{fwd.1} parent=0
    #allocation2 [shape = 'u8[2048]{0}', space=vmem, size = 0x800, scoped, tag = 'input window, operand 0, single buffered']
    #allocation3 [shape = 's32[1]{0}', space=sflag, size = 0x4, scoped, tag = 'scoped memory for fwd.1']
    #allocation4 [shape = 's32[1]{0}', space=sflag, size = 0x4, scoped, tag = 'scoped memory for fwd.1']
    #allocation5 [shape = 'u8[69632]{0}', space=vmem, size = 0x11000, scoped, tag = 'input window, operand 1, single buffered']
    #allocation6 [shape = 's32[1]{0}', space=sflag, size = 0x4, scoped, tag = 'scoped memory for fwd.1']
    #allocation7 [shape = 'u8[1024]{0}', space=vmem, size = 0x400, scoped, tag = 'input window, operand 3, single buffered']
    #allocation8 [shape = 'u8[1024]{0}', space=vmem, size = 0x400, scoped, tag = 'output window, operand 0, single buffered']
    %9 = vsyncpa [#allocation3], 0
    %10 = vsyncpa [#allocation6], 0
    %11 = vsyncpa [#allocation4], 0
    // Predicated region
    $region2: #{fwd.1} parent=1 // pred_check
      _
    $region3: #{fwd.1} parent=1 // pred_check_branch
      %13 = sbr.rel (0) target = $region5
    $region4: #{fwd.1} parent=1 // pred_region
      %15 = vsyncadd [#allocation3], 0
      %s17 = sshll.u32 %s0, 4
      %s18 = int_to_ptr.hbm [resolvable:$true] %s17
      %s19 = sshll.u32 [#allocation2], 4
      %s20 = int_to_ptr.vmem [resolvable:$true] %s19
      %22 = dma.hbm_to_vmem [thread:$0]  %s18, 64, %s20, [#allocation3]
    $region5: #{fwd.1} parent=1 // pred_fallthru
      _
    // Predicated region
    $region6: #{fwd.1} parent=1 // pred_check
      _
    $region7: #{fwd.1} parent=1 // pred_check_branch
      %24 = sbr.rel (0) target = $region9
    $region8: #{fwd.1} parent=1 // pred_region
      %26 = vsyncadd [#allocation6], 0
      %s27 = sshll.u32 %s1, 4
      %s28 = int_to_ptr.hbm [resolvable:$true] %s27
      %s29 = sshll.u32 [#allocation5], 4
      %s30 = int_to_ptr.vmem [resolvable:$true] %s29
      %35 = dma.hbm_to_vmem [thread:$0]  %s28, 2176, %s30, [#allocation6], 128, 128, 8
    $region9: #{fwd.1} parent=1 // pred_fallthru
      _
    // Predicated region
    $region10: #{fwd.1} parent=1 // pred_check
      _
    $region11: #{fwd.1} parent=1 // pred_check_branch
      %37 = sbr.rel (0) target = $region13
    $region12: #{fwd.1} parent=1 // pred_region
      _
    $region13: #{fwd.1} parent=1 // pred_fallthru
      _
    // Predicated region
    $region14: #{fwd.1} parent=1 // pred_check
      _
    $region15: #{fwd.1} parent=1 // pred_check_branch
      %39 = sbr.rel (0) target = $region17
    $region16: #{fwd.1} parent=1 // pred_region
      %41 = vsyncadd [#allocation6], 0
      %s43 = sshll.u32 %s3, 4
      %s44 = int_to_ptr.hbm [resolvable:$true] %s43
      %s45 = sshll.u32 [#allocation7], 4
      %s46 = int_to_ptr.vmem [resolvable:$true] %s45
      %48 = dma.hbm_to_vmem [thread:$0]  %s44, 32, %s46, [#allocation6]
    $region17: #{fwd.1} parent=1 // pred_fallthru
      _
    // Predicated region
    $region18: #{fwd.1} parent=1 // pred_check
      _
    $region19: #{fwd.1} parent=1 // pred_check_branch
      %50 = sbr.rel (0) target = $region21
    $region20: #{fwd.1} parent=1 // pred_region
      %52 = dma.done [#allocation3], 64
    $region21: #{fwd.1} parent=1 // pred_fallthru
      _
    // Predicated region
    $region22: #{fwd.1} parent=1 // pred_check
      _
    $region23: #{fwd.1} parent=1 // pred_check_branch
      %54 = sbr.rel (0) target = $region25
    $region24: #{fwd.1} parent=1 // pred_region
      %56 = dma.done [#allocation6], 2176
    $region25: #{fwd.1} parent=1 // pred_fallthru
      _
    // Predicated region
    $region26: #{fwd.1} parent=1 // pred_check
      _
    $region27: #{fwd.1} parent=1 // pred_check_branch
      %58 = sbr.rel (0) target = $region29
    $region28: #{fwd.1} parent=1 // pred_region
      %60 = dma.done [#allocation6], 32
    $region29: #{fwd.1} parent=1 // pred_fallthru
      _
    %v61 = vld [vmem:[#allocation2] sm:$0xf]
    %v62 = vld [vmem:[#allocation5] sm:$0xff]
    %v63 = vld [vmem:[#allocation5 + $0x8] sm:$0xff]
    %v64 = vld [vmem:[#allocation5 + $0x10] sm:$0xff]
    %v65 = vld [vmem:[#allocation5 + $0x18] sm:$0xff]
    %v66 = vld [vmem:[#allocation5 + $0x20] sm:$0xff]
    %v67 = vld [vmem:[#allocation5 + $0x28] sm:$0xff]
    %v68 = vld [vmem:[#allocation5 + $0x30] sm:$0xff]
    %v69 = vld [vmem:[#allocation5 + $0x38] sm:$0xff]
    %v70 = vld [vmem:[#allocation5 + $0x40] sm:$0xff]
    %v71 = vld [vmem:[#allocation5 + $0x48] sm:$0xff]
    %v72 = vld [vmem:[#allocation5 + $0x50] sm:$0xff]
    %v73 = vld [vmem:[#allocation5 + $0x58] sm:$0xff]
    %v74 = vld [vmem:[#allocation5 + $0x60] sm:$0xff]
    %v75 = vld [vmem:[#allocation5 + $0x68] sm:$0xff]
    %v76 = vld [vmem:[#allocation5 + $0x70] sm:$0xff]
    %v77 = vld [vmem:[#allocation5 + $0x78] sm:$0xff]
    %v78 = vld [vmem:[#allocation5 + $0x80] sm:$0x1f]
    %v79 = vld [vmem:[%s2] sm:$0x1]
    %v81 = vperm.slane %v79, 0
    %84 = vst [vmem:[#allocation1] ss:$4 sm:$0xff] %v61
    %v85 = vld.sshfl [vmem:[#allocation1] sm:$0xff pattern:$0x73625140]
    %v86 = vld.sshfl [vmem:[#allocation1 + $0x8] sm:$0xff pattern:$0x73625140]
    %vm88 = vcmask 39936
    %v89 = vsel %vm88, %v86, 0
    %vm91 = vcmask 1044480
    %v93 = vsel %vm91, %v78, 0
    %v95 = vand.u32 %v77, 4294901760
    %96 = vmatpush.msra.mxu0 %v95
    %v97 = vand.u32 %v76, 4294901760
    %98 = vmatpush.msra.mxu0 %v97
    %v99 = vand.u32 %v75, 4294901760
    %100 = vmatpush.msra.mxu0 %v99
    %v101 = vand.u32 %v74, 4294901760
    %102 = vmatpush.msra.mxu0 %v101
    %v103 = vand.u32 %v73, 4294901760
    %104 = vmatpush.msra.mxu0 %v103
    %v105 = vand.u32 %v72, 4294901760
    %106 = vmatpush.msra.mxu0 %v105
    %v107 = vand.u32 %v71, 4294901760
    %108 = vmatpush.msra.mxu0 %v107
    %v109 = vand.u32 %v70, 4294901760
    %110 = vmatpush.msra.mxu0 %v109
    %v111 = vand.u32 %v69, 4294901760
    %112 = vmatpush.msra.mxu0 %v111
    %v113 = vand.u32 %v68, 4294901760
    %114 = vmatpush.msra.mxu0 %v113
    %v115 = vand.u32 %v67, 4294901760
    %116 = vmatpush.msra.mxu0 %v115
    %v117 = vand.u32 %v66, 4294901760
    %118 = vmatpush.msra.mxu0 %v117
    %v119 = vand.u32 %v65, 4294901760
    %120 = vmatpush.msra.mxu0 %v119
    %v121 = vand.u32 %v64, 4294901760
    %122 = vmatpush.msra.mxu0 %v121
    %v123 = vand.u32 %v63, 4294901760
    %124 = vmatpush.msra.mxu0 %v123
    %v125 = vand.u32 %v62, 4294901760
    %126 = vmatpush.msra.mxu0 %v125
    %v127 = vand.u32 %v85, 4294901760
    %v128 = vsub.f32 %v85, %v127
    %v129 = vand.u32 %v128, 4294901760
    %v130 = vsub.f32 %v128, %v129
    %v131 = vand.u32 %v130, 4294901760
    %132 = vmatmul.f32.gmra.mxu0 %v131
    %v133 = vpop.f32.mrf.mxu0
    %v134 = vadd.f32 %v81, %v133
    %135 = vdwg.mxu0
    %v136 = vand.u32 %v77, 4294901760
    %v137 = vsub.f32 %v77, %v136
    %v138 = vand.u32 %v137, 4294901760
    %v139 = vsub.f32 %v137, %v138
    %v140 = vand.u32 %v139, 4294901760
    %141 = vmatpush.msra.mxu0 %v140
    %v142 = vand.u32 %v76, 4294901760
    %v143 = vsub.f32 %v76, %v142
    %v144 = vand.u32 %v143, 4294901760
    %v145 = vsub.f32 %v143, %v144
    %v146 = vand.u32 %v145, 4294901760
    %147 = vmatpush.msra.mxu0 %v146
    %v148 = vand.u32 %v75, 4294901760
    %v149 = vsub.f32 %v75, %v148
    %v150 = vand.u32 %v149, 4294901760
    %v151 = vsub.f32 %v149, %v150
    %v152 = vand.u32 %v151, 4294901760
    %153 = vmatpush.msra.mxu0 %v152
    %v154 = vand.u32 %v74, 4294901760
    %v155 = vsub.f32 %v74, %v154
    %v156 = vand.u32 %v155, 4294901760
    %v157 = vsub.f32 %v155, %v156
    %v158 = vand.u32 %v157, 4294901760
    %159 = vmatpush.msra.mxu0 %v158
    %v160 = vand.u32 %v73, 4294901760
    %v161 = vsub.f32 %v73, %v160
    %v162 = vand.u32 %v161, 4294901760
    %v163 = vsub.f32 %v161, %v162
    %v164 = vand.u32 %v163, 4294901760
    %165 = vmatpush.msra.mxu0 %v164
    %v166 = vand.u32 %v72, 4294901760
    %v167 = vsub.f32 %v72, %v166
    %v168 = vand.u32 %v167, 4294901760
    %v169 = vsub.f32 %v167, %v168
    %v170 = vand.u32 %v169, 4294901760
    %171 = vmatpush.msra.mxu0 %v170
    %v172 = vand.u32 %v71, 4294901760
    %v173 = vsub.f32 %v71, %v172
    %v174 = vand.u32 %v173, 4294901760
    %v175 = vsub.f32 %v173, %v174
    %v176 = vand.u32 %v175, 4294901760
    %177 = vmatpush.msra.mxu0 %v176
    %v178 = vand.u32 %v70, 4294901760
    %v179 = vsub.f32 %v70, %v178
    %v180 = vand.u32 %v179, 4294901760
    %v181 = vsub.f32 %v179, %v180
    %v182 = vand.u32 %v181, 4294901760
    %183 = vmatpush.msra.mxu0 %v182
    %v184 = vand.u32 %v69, 4294901760
    %v185 = vsub.f32 %v69, %v184
    %v186 = vand.u32 %v185, 4294901760
    %v187 = vsub.f32 %v185, %v186
    %v188 = vand.u32 %v187, 4294901760
    %189 = vmatpush.msra.mxu0 %v188
    %v190 = vand.u32 %v68, 4294901760
    %v191 = vsub.f32 %v68, %v190
    %v192 = vand.u32 %v191, 4294901760
    %v193 = vsub.f32 %v191, %v192
    %v194 = vand.u32 %v193, 4294901760
    %195 = vmatpush.msra.mxu0 %v194
    %v196 = vand.u32 %v67, 4294901760
    %v197 = vsub.f32 %v67, %v196
    %v198 = vand.u32 %v197, 4294901760
    %v199 = vsub.f32 %v197, %v198
    %v200 = vand.u32 %v199, 4294901760
    %201 = vmatpush.msra.mxu0 %v200
    %v202 = vand.u32 %v66, 4294901760
    %v203 = vsub.f32 %v66, %v202
    %v204 = vand.u32 %v203, 4294901760
    %v205 = vsub.f32 %v203, %v204
    %v206 = vand.u32 %v205, 4294901760
    %207 = vmatpush.msra.mxu0 %v206
    %v208 = vand.u32 %v65, 4294901760
    %v209 = vsub.f32 %v65, %v208
    %v210 = vand.u32 %v209, 4294901760
    %v211 = vsub.f32 %v209, %v210
    %v212 = vand.u32 %v211, 4294901760
    %213 = vmatpush.msra.mxu0 %v212
    %v214 = vand.u32 %v64, 4294901760
    %v215 = vsub.f32 %v64, %v214
    %v216 = vand.u32 %v215, 4294901760
    %v217 = vsub.f32 %v215, %v216
    %v218 = vand.u32 %v217, 4294901760
    %219 = vmatpush.msra.mxu0 %v218
    %v220 = vand.u32 %v63, 4294901760
    %v221 = vsub.f32 %v63, %v220
    %v222 = vand.u32 %v221, 4294901760
    %v223 = vsub.f32 %v221, %v222
    %v224 = vand.u32 %v223, 4294901760
    %225 = vmatpush.msra.mxu0 %v224
    %v226 = vand.u32 %v62, 4294901760
    %v227 = vsub.f32 %v62, %v226
    %v228 = vand.u32 %v227, 4294901760
    %v229 = vsub.f32 %v227, %v228
    %v230 = vand.u32 %v229, 4294901760
    %231 = vmatpush.msra.mxu0 %v230
    %v232 = vand.u32 %v85, 4294901760
    %233 = vmatmul.f32.gmra.mxu0 %v232
    %v234 = vpop.f32.mrf.mxu0
    %v235 = vadd.f32 %v134, %v234
    %236 = vdwg.mxu0
    %v237 = vand.u32 %v77, 4294901760
    %v238 = vsub.f32 %v77, %v237
    %239 = vmatpush.msra.mxu0 %v238
    %v240 = vand.u32 %v76, 4294901760
    %v241 = vsub.f32 %v76, %v240
    %242 = vmatpush.msra.mxu0 %v241
    %v243 = vand.u32 %v75, 4294901760
    %v244 = vsub.f32 %v75, %v243
    %245 = vmatpush.msra.mxu0 %v244
    %v246 = vand.u32 %v74, 4294901760
    %v247 = vsub.f32 %v74, %v246
    %248 = vmatpush.msra.mxu0 %v247
    %v249 = vand.u32 %v73, 4294901760
    %v250 = vsub.f32 %v73, %v249
    %251 = vmatpush.msra.mxu0 %v250
    %v252 = vand.u32 %v72, 4294901760
    %v253 = vsub.f32 %v72, %v252
    %254 = vmatpush.msra.mxu0 %v253
    %v255 = vand.u32 %v71, 4294901760
    %v256 = vsub.f32 %v71, %v255
    %257 = vmatpush.msra.mxu0 %v256
    %v258 = vand.u32 %v70, 4294901760
    %v259 = vsub.f32 %v70, %v258
    %260 = vmatpush.msra.mxu0 %v259
    %v261 = vand.u32 %v69, 4294901760
    %v262 = vsub.f32 %v69, %v261
    %263 = vmatpush.msra.mxu0 %v262
    %v264 = vand.u32 %v68, 4294901760
    %v265 = vsub.f32 %v68, %v264
    %266 = vmatpush.msra.mxu0 %v265
    %v267 = vand.u32 %v67, 4294901760
    %v268 = vsub.f32 %v67, %v267
    %269 = vmatpush.msra.mxu0 %v268
    %v270 = vand.u32 %v66, 4294901760
    %v271 = vsub.f32 %v66, %v270
    %272 = vmatpush.msra.mxu0 %v271
    %v273 = vand.u32 %v65, 4294901760
    %v274 = vsub.f32 %v65, %v273
    %275 = vmatpush.msra.mxu0 %v274
    %v276 = vand.u32 %v64, 4294901760
    %v277 = vsub.f32 %v64, %v276
    %278 = vmatpush.msra.mxu0 %v277
    %v279 = vand.u32 %v63, 4294901760
    %v280 = vsub.f32 %v63, %v279
    %281 = vmatpush.msra.mxu0 %v280
    %v282 = vand.u32 %v62, 4294901760
    %v283 = vsub.f32 %v62, %v282
    %284 = vmatpush.msra.mxu0 %v283
    %v285 = vand.u32 %v85, 4294901760
    %v286 = vsub.f32 %v85, %v285
    %287 = vmatmul.f32.gmra.mxu0 %v286
    %v288 = vpop.f32.mrf.mxu0
    %v289 = vadd.f32 %v235, %v288
    %290 = vdwg.mxu0
    %v291 = vand.u32 %v77, 4294901760
    %292 = vmatpush.msra.mxu0 %v291
    %v293 = vand.u32 %v76, 4294901760
    %294 = vmatpush.msra.mxu0 %v293
    %v295 = vand.u32 %v75, 4294901760
    %296 = vmatpush.msra.mxu0 %v295
    %v297 = vand.u32 %v74, 4294901760
    %298 = vmatpush.msra.mxu0 %v297
    %v299 = vand.u32 %v73, 4294901760
    %300 = vmatpush.msra.mxu0 %v299
    %v301 = vand.u32 %v72, 4294901760
    %302 = vmatpush.msra.mxu0 %v301
    %v303 = vand.u32 %v71, 4294901760
    %304 = vmatpush.msra.mxu0 %v303
    %v305 = vand.u32 %v70, 4294901760
    %306 = vmatpush.msra.mxu0 %v305
    %v307 = vand.u32 %v69, 4294901760
    %308 = vmatpush.msra.mxu0 %v307
    %v309 = vand.u32 %v68, 4294901760
    %310 = vmatpush.msra.mxu0 %v309
    %v311 = vand.u32 %v67, 4294901760
    %312 = vmatpush.msra.mxu0 %v311
    %v313 = vand.u32 %v66, 4294901760
    %314 = vmatpush.msra.mxu0 %v313
    %v315 = vand.u32 %v65, 4294901760
    %316 = vmatpush.msra.mxu0 %v315
    %v317 = vand.u32 %v64, 4294901760
    %318 = vmatpush.msra.mxu0 %v317
    %v319 = vand.u32 %v63, 4294901760
    %320 = vmatpush.msra.mxu0 %v319
    %v321 = vand.u32 %v62, 4294901760
    %322 = vmatpush.msra.mxu0 %v321
    %v323 = vand.u32 %v85, 4294901760
    %v324 = vsub.f32 %v85, %v323
    %v325 = vand.u32 %v324, 4294901760
    %326 = vmatmul.f32.gmra.mxu0 %v325
    %v327 = vpop.f32.mrf.mxu0
    %v328 = vadd.f32 %v289, %v327
    %329 = vdwg.mxu0
    %v330 = vand.u32 %v77, 4294901760
    %v331 = vsub.f32 %v77, %v330
    %v332 = vand.u32 %v331, 4294901760
    %333 = vmatpush.msra.mxu0 %v332
    %v334 = vand.u32 %v76, 4294901760
    %v335 = vsub.f32 %v76, %v334
    %v336 = vand.u32 %v335, 4294901760
    %337 = vmatpush.msra.mxu0 %v336
    %v338 = vand.u32 %v75, 4294901760
    %v339 = vsub.f32 %v75, %v338
    %v340 = vand.u32 %v339, 4294901760
    %341 = vmatpush.msra.mxu0 %v340
    %v342 = vand.u32 %v74, 4294901760
    %v343 = vsub.f32 %v74, %v342
    %v344 = vand.u32 %v343, 4294901760
    %345 = vmatpush.msra.mxu0 %v344
    %v346 = vand.u32 %v73, 4294901760
    %v347 = vsub.f32 %v73, %v346
    %v348 = vand.u32 %v347, 4294901760
    %349 = vmatpush.msra.mxu0 %v348
    %v350 = vand.u32 %v72, 4294901760
    %v351 = vsub.f32 %v72, %v350
    %v352 = vand.u32 %v351, 4294901760
    %353 = vmatpush.msra.mxu0 %v352
    %v354 = vand.u32 %v71, 4294901760
    %v355 = vsub.f32 %v71, %v354
    %v356 = vand.u32 %v355, 4294901760
    %357 = vmatpush.msra.mxu0 %v356
    %v358 = vand.u32 %v70, 4294901760
    %v359 = vsub.f32 %v70, %v358
    %v360 = vand.u32 %v359, 4294901760
    %361 = vmatpush.msra.mxu0 %v360
    %v362 = vand.u32 %v69, 4294901760
    %v363 = vsub.f32 %v69, %v362
    %v364 = vand.u32 %v363, 4294901760
    %365 = vmatpush.msra.mxu0 %v364
    %v366 = vand.u32 %v68, 4294901760
    %v367 = vsub.f32 %v68, %v366
    %v368 = vand.u32 %v367, 4294901760
    %369 = vmatpush.msra.mxu0 %v368
    %v370 = vand.u32 %v67, 4294901760
    %v371 = vsub.f32 %v67, %v370
    %v372 = vand.u32 %v371, 4294901760
    %373 = vmatpush.msra.mxu0 %v372
    %v374 = vand.u32 %v66, 4294901760
    %v375 = vsub.f32 %v66, %v374
    %v376 = vand.u32 %v375, 4294901760
    %377 = vmatpush.msra.mxu0 %v376
    %v378 = vand.u32 %v65, 4294901760
    %v379 = vsub.f32 %v65, %v378
    %v380 = vand.u32 %v379, 4294901760
    %381 = vmatpush.msra.mxu0 %v380
    %v382 = vand.u32 %v64, 4294901760
    %v383 = vsub.f32 %v64, %v382
    %v384 = vand.u32 %v383, 4294901760
    %385 = vmatpush.msra.mxu0 %v384
    %v386 = vand.u32 %v63, 4294901760
    %v387 = vsub.f32 %v63, %v386
    %v388 = vand.u32 %v387, 4294901760
    %389 = vmatpush.msra.mxu0 %v388
    %v390 = vand.u32 %v62, 4294901760
    %v391 = vsub.f32 %v62, %v390
    %v392 = vand.u32 %v391, 4294901760
    %393 = vmatpush.msra.mxu0 %v392
    %v394 = vand.u32 %v85, 4294901760
    %395 = vmatmul.f32.gmra.mxu0 %v394
    %v396 = vpop.f32.mrf.mxu0
    %v397 = vadd.f32 %v328, %v396
    %398 = vdwg.mxu0
    %v399 = vand.u32 %v77, 4294901760
    %400 = vmatpush.msra.mxu0 %v399
    %v401 = vand.u32 %v76, 4294901760
    %402 = vmatpush.msra.mxu0 %v401
    %v403 = vand.u32 %v75, 4294901760
    %404 = vmatpush.msra.mxu0 %v403
    %v405 = vand.u32 %v74, 4294901760
    %406 = vmatpush.msra.mxu0 %v405
    %v407 = vand.u32 %v73, 4294901760
    %408 = vmatpush.msra.mxu0 %v407
    %v409 = vand.u32 %v72, 4294901760
    %410 = vmatpush.msra.mxu0 %v409
    %v411 = vand.u32 %v71, 4294901760
    %412 = vmatpush.msra.mxu0 %v411
    %v413 = vand.u32 %v70, 4294901760
    %414 = vmatpush.msra.mxu0 %v413
    %v415 = vand.u32 %v69, 4294901760
    %416 = vmatpush.msra.mxu0 %v415
    %v417 = vand.u32 %v68, 4294901760
    %418 = vmatpush.msra.mxu0 %v417
    %v419 = vand.u32 %v67, 4294901760
    %420 = vmatpush.msra.mxu0 %v419
    %v421 = vand.u32 %v66, 4294901760
    %422 = vmatpush.msra.mxu0 %v421
    %v423 = vand.u32 %v65, 4294901760
    %424 = vmatpush.msra.mxu0 %v423
    %v425 = vand.u32 %v64, 4294901760
    %426 = vmatpush.msra.mxu0 %v425
    %v427 = vand.u32 %v63, 4294901760
    %428 = vmatpush.msra.mxu0 %v427
    %v429 = vand.u32 %v62, 4294901760
    %430 = vmatpush.msra.mxu0 %v429
    %v431 = vand.u32 %v85, 4294901760
    %432 = vmatmul.f32.gmra.mxu0 %v431
    %v433 = vpop.f32.mrf.mxu0
    %v434 = vadd.f32 %v397, %v433
    %435 = vdwg.mxu0
    %436 = vmatpush.msra.mxu0 0.0
    %437 = vmatpush.msra.mxu0 0.0
    %438 = vmatpush.msra.mxu0 0.0
    %439 = vmatpush.msra.mxu0 0.0
    %440 = vmatpush.msra.mxu0 0.0
    %441 = vmatpush.msra.mxu0 0.0
    %442 = vmatpush.msra.mxu0 0.0
    %443 = vmatpush.msra.mxu0 0.0
    %444 = vmatpush.msra.mxu0 0.0
    %445 = vmatpush.msra.mxu0 0.0
    %446 = vmatpush.msra.mxu0 0.0
    %447 = vmatpush.msra.mxu0 0.0
    %448 = vmatpush.msra.mxu0 0.0
    %449 = vmatpush.msra.mxu0 0.0
    %450 = vmatpush.msra.mxu0 0.0
    %v451 = vand.u32 %v93, 4294901760
    %452 = vmatpush.msra.mxu0 %v451
    %v453 = vand.u32 %v89, 4294901760
    %v454 = vsub.f32 %v89, %v453
    %v455 = vand.u32 %v454, 4294901760
    %v456 = vsub.f32 %v454, %v455
    %v457 = vand.u32 %v456, 4294901760
    %458 = vmatmul.f32.gmra.mxu0 %v457
    %v459 = vpop.f32.mrf.mxu0
    %v460 = vadd.f32 %v434, %v459
    %461 = vdwg.mxu0
    %462 = vmatpush.msra.mxu0 0.0
    %463 = vmatpush.msra.mxu0 0.0
    %464 = vmatpush.msra.mxu0 0.0
    %465 = vmatpush.msra.mxu0 0.0
    %466 = vmatpush.msra.mxu0 0.0
    %467 = vmatpush.msra.mxu0 0.0
    %468 = vmatpush.msra.mxu0 0.0
    %469 = vmatpush.msra.mxu0 0.0
    %470 = vmatpush.msra.mxu0 0.0
    %471 = vmatpush.msra.mxu0 0.0
    %472 = vmatpush.msra.mxu0 0.0
    %473 = vmatpush.msra.mxu0 0.0
    %474 = vmatpush.msra.mxu0 0.0
    %475 = vmatpush.msra.mxu0 0.0
    %476 = vmatpush.msra.mxu0 0.0
    %v477 = vand.u32 %v93, 4294901760
    %v478 = vsub.f32 %v93, %v477
    %v479 = vand.u32 %v478, 4294901760
    %v480 = vsub.f32 %v478, %v479
    %v481 = vand.u32 %v480, 4294901760
    %482 = vmatpush.msra.mxu0 %v481
    %v483 = vand.u32 %v89, 4294901760
    %484 = vmatmul.f32.gmra.mxu0 %v483
    %v485 = vpop.f32.mrf.mxu0
    %v486 = vadd.f32 %v460, %v485
    %487 = vdwg.mxu0
    %488 = vmatpush.msra.mxu0 0.0
    %489 = vmatpush.msra.mxu0 0.0
    %490 = vmatpush.msra.mxu0 0.0
    %491 = vmatpush.msra.mxu0 0.0
    %492 = vmatpush.msra.mxu0 0.0
    %493 = vmatpush.msra.mxu0 0.0
    %494 = vmatpush.msra.mxu0 0.0
    %495 = vmatpush.msra.mxu0 0.0
    %496 = vmatpush.msra.mxu0 0.0
    %497 = vmatpush.msra.mxu0 0.0
    %498 = vmatpush.msra.mxu0 0.0
    %499 = vmatpush.msra.mxu0 0.0
    %500 = vmatpush.msra.mxu0 0.0
    %501 = vmatpush.msra.mxu0 0.0
    %502 = vmatpush.msra.mxu0 0.0
    %v503 = vand.u32 %v93, 4294901760
    %v504 = vsub.f32 %v93, %v503
    %505 = vmatpush.msra.mxu0 %v504
    %v506 = vand.u32 %v89, 4294901760
    %v507 = vsub.f32 %v89, %v506
    %508 = vmatmul.f32.gmra.mxu0 %v507
    %v509 = vpop.f32.mrf.mxu0
    %v510 = vadd.f32 %v486, %v509
    %511 = vdwg.mxu0
    %512 = vmatpush.msra.mxu0 0.0
    %513 = vmatpush.msra.mxu0 0.0
    %514 = vmatpush.msra.mxu0 0.0
    %515 = vmatpush.msra.mxu0 0.0
    %516 = vmatpush.msra.mxu0 0.0
    %517 = vmatpush.msra.mxu0 0.0
    %518 = vmatpush.msra.mxu0 0.0
    %519 = vmatpush.msra.mxu0 0.0
    %520 = vmatpush.msra.mxu0 0.0
    %521 = vmatpush.msra.mxu0 0.0
    %522 = vmatpush.msra.mxu0 0.0
    %523 = vmatpush.msra.mxu0 0.0
    %524 = vmatpush.msra.mxu0 0.0
    %525 = vmatpush.msra.mxu0 0.0
    %526 = vmatpush.msra.mxu0 0.0
    %v527 = vand.u32 %v93, 4294901760
    %528 = vmatpush.msra.mxu0 %v527
    %v529 = vand.u32 %v89, 4294901760
    %v530 = vsub.f32 %v89, %v529
    %v531 = vand.u32 %v530, 4294901760
    %532 = vmatmul.f32.gmra.mxu0 %v531
    %v533 = vpop.f32.mrf.mxu0
    %v534 = vadd.f32 %v510, %v533
    %535 = vdwg.mxu0
    %536 = vmatpush.msra.mxu0 0.0
    %537 = vmatpush.msra.mxu0 0.0
    %538 = vmatpush.msra.mxu0 0.0
    %539 = vmatpush.msra.mxu0 0.0
    %540 = vmatpush.msra.mxu0 0.0
    %541 = vmatpush.msra.mxu0 0.0
    %542 = vmatpush.msra.mxu0 0.0
    %543 = vmatpush.msra.mxu0 0.0
    %544 = vmatpush.msra.mxu0 0.0
    %545 = vmatpush.msra.mxu0 0.0
    %546 = vmatpush.msra.mxu0 0.0
    %547 = vmatpush.msra.mxu0 0.0
    %548 = vmatpush.msra.mxu0 0.0
    %549 = vmatpush.msra.mxu0 0.0
    %550 = vmatpush.msra.mxu0 0.0
    %v551 = vand.u32 %v93, 4294901760
    %v552 = vsub.f32 %v93, %v551
    %v553 = vand.u32 %v552, 4294901760
    %554 = vmatpush.msra.mxu0 %v553
    %v555 = vand.u32 %v89, 4294901760
    %556 = vmatmul.f32.gmra.mxu0 %v555
    %v557 = vpop.f32.mrf.mxu0
    %v558 = vadd.f32 %v534, %v557
    %559 = vdwg.mxu0
    %560 = vmatpush.msra.mxu0 0.0
    %561 = vmatpush.msra.mxu0 0.0
    %562 = vmatpush.msra.mxu0 0.0
    %563 = vmatpush.msra.mxu0 0.0
    %564 = vmatpush.msra.mxu0 0.0
    %565 = vmatpush.msra.mxu0 0.0
    %566 = vmatpush.msra.mxu0 0.0
    %567 = vmatpush.msra.mxu0 0.0
    %568 = vmatpush.msra.mxu0 0.0
    %569 = vmatpush.msra.mxu0 0.0
    %570 = vmatpush.msra.mxu0 0.0
    %571 = vmatpush.msra.mxu0 0.0
    %572 = vmatpush.msra.mxu0 0.0
    %573 = vmatpush.msra.mxu0 0.0
    %574 = vmatpush.msra.mxu0 0.0
    %v575 = vand.u32 %v93, 4294901760
    %576 = vmatpush.msra.mxu0 %v575
    %v577 = vand.u32 %v89, 4294901760
    %578 = vmatmul.f32.gmra.mxu0 %v577
    %v579 = vpop.f32.mrf.mxu0
    %v580 = vadd.f32 %v558, %v579
    %581 = vdwg.mxu0
    %v582 = vld [vmem:[#allocation7] sm:$0x3]
    %v583 = vadd.f32 %v580, %v582
    %vm584 = vcmask 754688
    %585 = vst.msk [vmem:[#allocation8] sm:$0x3] %vm584, %v583
    // Predicated region
    $region30: #{fwd.1} parent=1 // pred_check
      _
    $region31: #{fwd.1} parent=1 // pred_check_branch
      %587 = sbr.rel (0) target = $region33
    $region32: #{fwd.1} parent=1 // pred_region
      %589 = vsyncadd [#allocation4], 0
      %s591 = sshll.u32 [#allocation8], 4
      %s592 = int_to_ptr.vmem [resolvable:$true] %s591
      %s593 = sshll.u32 %s4, 4
      %s594 = int_to_ptr.hbm [resolvable:$true] %s593
      %596 = dma.vmem_to_hbm [thread:$0]  %s592, 32, %s594, [#allocation4]
    $region33: #{fwd.1} parent=1 // pred_fallthru
      _
    // Predicated region
    $region34: #{fwd.1} parent=1 // pred_check
      _
    $region35: #{fwd.1} parent=1 // pred_check_branch
      %598 = sbr.rel (0) target = $region37
    $region36: #{fwd.1} parent=1 // pred_region
      %600 = dma.done [#allocation4], 32
    $region37: #{fwd.1} parent=1 // pred_fallthru
      _
    %601 = vsyncpa [#allocation3], 1
    %602 = vsyncpa [#allocation6], 1
    %603 = vsyncpa [#allocation4], 1

</llo_original>
